<compile_context>
chip_gen: v5e
topology: v5e:2x2
jax: 0.10.0
libtpu: 0.0.40
codegen_flags: <defaults>
</compile_context>

<pallas_src>
import functools
import math

import jax
import jax.numpy as jnp
from jax.experimental import pallas as pl
from jax.experimental.pallas import tpu as pltpu

LN_EPS = 1e-5


def _patch_merging_kernel(x_ref, ln_ref, wev_ref, wod_ref, o_ref):
    # x_ref:   (tr, 2, W2, 2C)  tr row-pairs; dim 1 selects even/odd source row
    #                           even row packs [x0|x2], odd row packs [x1|x3]
    # ln_ref:  (4, 2C) f32      rows: gamma_ev, gamma_od, beta_ev, beta_od
    # wev_ref: (2C, 2C) bf16    reduction-weight rows for the [x0|x2] features
    # wod_ref: (2C, 2C) bf16    reduction-weight rows for the [x1|x3] features
    # o_ref:   (tr*W2, 2C)      output tokens
    tr, _, w2, c2 = x_ref.shape

    ev = x_ref[:, 0, :, :].astype(jnp.float32).reshape(tr * w2, c2)  # [x0 | x2]
    od = x_ref[:, 1, :, :].astype(jnp.float32).reshape(tr * w2, c2)  # [x1 | x3]

    # LayerNorm over the (split) 4C feature axis, f32 math.
    inv_c4 = 1.0 / (2.0 * c2)
    mean = (jnp.sum(ev, axis=-1, keepdims=True)
            + jnp.sum(od, axis=-1, keepdims=True)) * inv_c4
    cev = ev - mean
    cod = od - mean
    var = (jnp.sum(cev * cev, axis=-1, keepdims=True)
           + jnp.sum(cod * cod, axis=-1, keepdims=True)) * inv_c4
    rstd = jax.lax.rsqrt(var + LN_EPS)

    nev = cev * rstd * ln_ref[0:1, :] + ln_ref[2:3, :]
    nod = cod * rstd * ln_ref[1:2, :] + ln_ref[3:4, :]

    # 4C -> 2C reduction on the MXU as two K=2C matmuls (bf16 in, f32 acc).
    y = jnp.dot(nev.astype(jnp.bfloat16), wev_ref[...],
                preferred_element_type=jnp.float32)
    y = y + jnp.dot(nod.astype(jnp.bfloat16), wod_ref[...],
                    preferred_element_type=jnp.float32)
    o_ref[...] = y.astype(o_ref.dtype)


def _pick_row_tile(n_pairs, w2, c4, c2, in_bytes, out_bytes,
                   target_tokens=1024, vmem_budget=40 * 1024 * 1024):
    """Row-pair tile size. Keeps (tile * W2) % 8 == 0 (sublane-clean), fits VMEM."""
    g = 8 // math.gcd(w2, 8)

    def est(tr):
        tok = tr * w2
        return (2 * tok * c4 * in_bytes      # double-buffered input block
                + 2 * tok * c2 * out_bytes   # double-buffered output block
                + 2 * c2 * c2 * 2            # resident bf16 weights
                + 5 * tok * c4 * 4)          # rough f32 working values

    tr = max(1, target_tokens // max(w2, 1))
    tr = max(g, (tr // g) * g)
    while tr > g and est(tr) > vmem_budget:
        tr = max(g, ((tr // 2) // g) * g)
    if tr >= n_pairs:
        # try to keep >= 2 grid steps (v7x megacore) while staying aligned;
        # tr == n_pairs is always legal (single block covers the full array).
        half = ((n_pairs // 2) // g) * g
        tr = half if half > 0 else n_pairs
    return tr


@functools.partial(jax.jit, static_argnames=("H", "W"))
def patch_merging_forward(x, gamma, beta, w_t, *, H, W):
    """Fused PatchMerging forward: 2x2 merge + LayerNorm(4C) + Linear(4C->2C).

    Args:
      x:     (B, H*W, C) input tokens.
      gamma: (4C,) LayerNorm weight.   beta: (4C,) LayerNorm bias.
      w_t:   (4C, 2C) reduction weight, transposed so y = x_norm @ w_t, with
             input-feature order [x0|x1|x2|x3] exactly as in the PyTorch module.
      H, W:  spatial resolution.
    Returns:
      (B, ceil(H/2)*ceil(W/2), 2C), dtype of x.
    """
    B, L, C = x.shape
    assert L == H * W, "input feature has wrong size"
    C4, C2 = 4 * C, 2 * C

    x = x.reshape(B, H, W, C)
    if (H % 2) or (W % 2):
        # Rare path: only pays one HBM copy when spatial dims are odd.
        x = jnp.pad(x, ((0, 0), (0, H % 2), (0, W % 2), (0, 0)))
    Hp, Wp = H + (H % 2), W + (W % 2)
    H2, W2 = Hp // 2, Wp // 2

    # Free row-major reshape: (B*H2) row-pairs x {even,odd row} x W2 x 2C.
    R = B * H2
    xr = x.reshape(R, 2, W2, C2)

    # Permute/split parameters once (tiny, param-sized) so the kernel never has
    # to rebuild the [x0|x1|x2|x3] lane order: even-row features are [x0|x2],
    # odd-row features are [x1|x3]; LayerNorm stats are permutation invariant.
    def split_even_odd(p):
        return (jnp.concatenate([p[0:C], p[2 * C:3 * C]], axis=0),
                jnp.concatenate([p[C:2 * C], p[3 * C:4 * C]], axis=0))

    g_ev, g_od = split_even_odd(gamma.astype(jnp.float32))
    b_ev, b_od = split_even_odd(beta.astype(jnp.float32))
    ln = jnp.stack([g_ev, g_od, b_ev, b_od], axis=0)                 # (4, 2C)

    w_ev = jnp.concatenate([w_t[0:C], w_t[2 * C:3 * C]], axis=0).astype(jnp.bfloat16)
    w_od = jnp.concatenate([w_t[C:2 * C], w_t[3 * C:4 * C]], axis=0).astype(jnp.bfloat16)

    out_dtype = x.dtype
    in_bytes = jnp.dtype(x.dtype).itemsize
    out_bytes = jnp.dtype(out_dtype).itemsize
    tr = _pick_row_tile(R, W2, C4, C2, in_bytes, out_bytes)
    grid = (pl.cdiv(R, tr),)
    N = R * W2

    cost = pl.CostEstimate(
        flops=2 * N * C4 * C2,
        transcendentals=N,  # one rsqrt per merged token
        bytes_accessed=N * C4 * in_bytes + N * C2 * out_bytes + C4 * C2 * 2)

    out = pl.pallas_call(
        _patch_merging_kernel,
        out_shape=jax.ShapeDtypeStruct((N, C2), out_dtype),
        grid_spec=pltpu.PrefetchScalarGridSpec(
            num_scalar_prefetch=0,
            grid=grid,
            in_specs=[
                pl.BlockSpec((tr, 2, W2, C2), lambda i: (i, 0, 0, 0)),  # x row-pairs
                pl.BlockSpec((4, C2), lambda i: (0, 0)),                # LN params
                pl.BlockSpec((C2, C2), lambda i: (0, 0)),               # W_ev (bf16)
                pl.BlockSpec((C2, C2), lambda i: (0, 0)),               # W_od (bf16)
            ],
            out_specs=pl.BlockSpec((tr * W2, C2), lambda i: (i, 0)),
        ),
        compiler_params=pltpu.CompilerParams(
            dimension_semantics=("parallel",),
            vmem_limit_bytes=48 * 1024 * 1024),
        cost_estimate=cost,
    )(xr, ln, w_ev, w_od)

    return out.reshape(B, H2 * W2, C2)


if __name__ == "__main__":
    # Small, TPU-friendly shapes: C = 64 so 4C = 256 and 2C = 128 (lane-dense output).
    B, H, W, C = 2, 16, 16, 64

    key = jax.random.PRNGKey(0)
    kx, kw, kg, kb = jax.random.split(key, 4)

    x = jax.random.normal(kx, (B, H * W, C), dtype=jnp.float32)

    # Parameters matching nn.LayerNorm(4C) / nn.Linear(4C, 2C, bias=False) shapes.
    w_reduction = jax.random.normal(kw, (2 * C, 4 * C), dtype=jnp.float32) * 0.02
    w_t = w_reduction.T                                   # (4C, 2C): y = x_norm @ w_t
    gamma = 1.0 + 0.1 * jax.random.normal(kg, (4 * C,), dtype=jnp.float32)
    beta = 0.1 * jax.random.normal(kb, (4 * C,), dtype=jnp.float32)

    out = patch_merging_forward(x, gamma, beta, w_t, H=H, W=W)
    out = jax.block_until_ready(out)

    # Pure-JAX f32 reference with the PyTorch module's semantics.
    xr = x.reshape(B, H, W, C)
    x0 = xr[:, 0::2, 0::2, :]
    x1 = xr[:, 1::2, 0::2, :]
    x2 = xr[:, 0::2, 1::2, :]
    x3 = xr[:, 1::2, 1::2, :]
    xc = jnp.concatenate([x0, x1, x2, x3], -1).reshape(B, -1, 4 * C)
    mean = jnp.mean(xc, -1, keepdims=True)
    var = jnp.mean((xc - mean) ** 2, -1, keepdims=True)
    xn = (xc - mean) / jnp.sqrt(var + LN_EPS) * gamma + beta
    ref = jnp.einsum("bld,dk->blk", xn, w_t)

    assert out.shape == (B, (H // 2) * (W // 2), 2 * C), out.shape
    err = float(jnp.max(jnp.abs(out - ref)))
    # bf16 MXU operands (f32 accumulation) => allow ~1e-2 absolute error here.
    assert err < 3e-2, err
    print("KERNEL_OK")
</pallas_src>

<mosaic_0001>
module attributes {stable_mosaic.version = 11 : i64} {
  func.func @_patch_merging_kernel(%arg0: i32, %arg1: memref<8x2x8x128xf32, #tpu.memory_space<vmem>>, %arg2: memref<4x128xf32, #tpu.memory_space<vmem>>, %arg3: memref<128x128xbf16, #tpu.memory_space<vmem>>, %arg4: memref<128x128xbf16, #tpu.memory_space<vmem>>, %arg5: memref<64x128xf32, #tpu.memory_space<vmem>>) attributes {dimension_semantics = [#tpu.dimension_semantics<parallel>], iteration_bounds = array<i64: 2>, scalar_prefetch = 0 : i64, scratch_operands = 0 : i64, tpu.core_type = #tpu.core_type<tc>, window_params = [{transform_indices = @transform_0, window_bounds = array<i64: 8, 2, 8, 128>}, {pipeline_mode = #tpu.pipeline_mode<synchronous>, transform_indices = @transform_1, window_bounds = array<i64: 4, 128>}, {pipeline_mode = #tpu.pipeline_mode<synchronous>, transform_indices = @transform_2, window_bounds = array<i64: 128, 128>}, {pipeline_mode = #tpu.pipeline_mode<synchronous>, transform_indices = @transform_3, window_bounds = array<i64: 128, 128>}, {transform_indices = @transform_4, window_bounds = array<i64: 64, 128>}]} {
    %c0 = arith.constant 0 : index
    %c0_0 = arith.constant 0 : index
    %c0_1 = arith.constant 0 : index
    %c0_2 = arith.constant 0 : index
    %0 = vector.load %arg1[%c0, %c0_0, %c0_1, %c0_2] : memref<8x2x8x128xf32, #tpu.memory_space<vmem>>, vector<8x1x8x128xf32>
    %1 = vector.shape_cast %0 : vector<8x1x8x128xf32> to vector<8x8x128xf32>
    %2 = vector.shape_cast %1 : vector<8x8x128xf32> to vector<64x128xf32>
    %c0_3 = arith.constant 0 : index
    %c1 = arith.constant 1 : index
    %c0_4 = arith.constant 0 : index
    %c0_5 = arith.constant 0 : index
    %3 = vector.load %arg1[%c0_3, %c1, %c0_4, %c0_5] : memref<8x2x8x128xf32, #tpu.memory_space<vmem>>, vector<8x1x8x128xf32>
    %4 = vector.shape_cast %3 : vector<8x1x8x128xf32> to vector<8x8x128xf32>
    %5 = vector.shape_cast %4 : vector<8x8x128xf32> to vector<64x128xf32>
    %cst = arith.constant dense<0.000000e+00> : vector<64xf32>
    %6 = vector.multi_reduction <add>, %2, %cst [1] : vector<64x128xf32> to vector<64xf32>
    %7 = vector.shape_cast %6 : vector<64xf32> to vector<64x1xf32>
    %cst_6 = arith.constant dense<0.000000e+00> : vector<64xf32>
    %8 = vector.multi_reduction <add>, %5, %cst_6 [1] : vector<64x128xf32> to vector<64xf32>
    %9 = vector.shape_cast %8 : vector<64xf32> to vector<64x1xf32>
    %10 = arith.addf %7, %9 : vector<64x1xf32>
    %cst_7 = arith.constant 3.906250e-03 : f32
    %11 = vector.broadcast %cst_7 : f32 to vector<64x1xf32>
    %12 = arith.mulf %10, %11 : vector<64x1xf32>
    %13 = vector.broadcast %12 : vector<64x1xf32> to vector<64x128xf32>
    %14 = arith.subf %2, %13 : vector<64x128xf32>
    %15 = vector.broadcast %12 : vector<64x1xf32> to vector<64x128xf32>
    %16 = arith.subf %5, %15 : vector<64x128xf32>
    %17 = arith.mulf %14, %14 : vector<64x128xf32>
    %cst_8 = arith.constant dense<0.000000e+00> : vector<64xf32>
    %18 = vector.multi_reduction <add>, %17, %cst_8 [1] : vector<64x128xf32> to vector<64xf32>
    %19 = vector.shape_cast %18 : vector<64xf32> to vector<64x1xf32>
    %20 = arith.mulf %16, %16 : vector<64x128xf32>
    %cst_9 = arith.constant dense<0.000000e+00> : vector<64xf32>
    %21 = vector.multi_reduction <add>, %20, %cst_9 [1] : vector<64x128xf32> to vector<64xf32>
    %22 = vector.shape_cast %21 : vector<64xf32> to vector<64x1xf32>
    %23 = arith.addf %19, %22 : vector<64x1xf32>
    %cst_10 = arith.constant 3.906250e-03 : f32
    %24 = vector.broadcast %cst_10 : f32 to vector<64x1xf32>
    %25 = arith.mulf %23, %24 : vector<64x1xf32>
    %cst_11 = arith.constant 9.99999974E-6 : f32
    %26 = vector.broadcast %cst_11 : f32 to vector<64x1xf32>
    %27 = arith.addf %25, %26 : vector<64x1xf32>
    %28 = math.rsqrt %27 : vector<64x1xf32>
    %29 = vector.broadcast %28 : vector<64x1xf32> to vector<64x128xf32>
    %30 = arith.mulf %14, %29 : vector<64x128xf32>
    %c0_12 = arith.constant 0 : index
    %c0_13 = arith.constant 0 : index
    %31 = vector.load %arg2[%c0_12, %c0_13] : memref<4x128xf32, #tpu.memory_space<vmem>>, vector<1x128xf32>
    %32 = vector.broadcast %31 : vector<1x128xf32> to vector<64x128xf32>
    %33 = arith.mulf %30, %32 : vector<64x128xf32>
    %c2 = arith.constant 2 : index
    %c0_14 = arith.constant 0 : index
    %34 = vector.load %arg2[%c2, %c0_14] : memref<4x128xf32, #tpu.memory_space<vmem>>, vector<1x128xf32>
    %35 = vector.broadcast %34 : vector<1x128xf32> to vector<64x128xf32>
    %36 = arith.addf %33, %35 : vector<64x128xf32>
    %37 = vector.broadcast %28 : vector<64x1xf32> to vector<64x128xf32>
    %38 = arith.mulf %16, %37 : vector<64x128xf32>
    %c1_15 = arith.constant 1 : index
    %c0_16 = arith.constant 0 : index
    %39 = vector.load %arg2[%c1_15, %c0_16] : memref<4x128xf32, #tpu.memory_space<vmem>>, vector<1x128xf32>
    %40 = vector.broadcast %39 : vector<1x128xf32> to vector<64x128xf32>
    %41 = arith.mulf %38, %40 : vector<64x128xf32>
    %c3 = arith.constant 3 : index
    %c0_17 = arith.constant 0 : index
    %42 = vector.load %arg2[%c3, %c0_17] : memref<4x128xf32, #tpu.memory_space<vmem>>, vector<1x128xf32>
    %43 = vector.broadcast %42 : vector<1x128xf32> to vector<64x128xf32>
    %44 = arith.addf %41, %43 : vector<64x128xf32>
    %45 = arith.truncf %36 : vector<64x128xf32> to vector<64x128xbf16>
    %c0_18 = arith.constant 0 : index
    %c0_19 = arith.constant 0 : index
    %46 = vector.load %arg3[%c0_18, %c0_19] : memref<128x128xbf16, #tpu.memory_space<vmem>>, vector<128x128xbf16>
    %cst_20 = arith.constant dense<0.000000e+00> : vector<64x128xf32>
    %47 = tpu.matmul %45, %46, %cst_20 {dimension_numbers = #tpu.dot_dimension_numbers<[1], [0], [0], [1], [0, 0, 1, 1], [], []>} : vector<64x128xbf16>, vector<128x128xbf16>, vector<64x128xf32> -> vector<64x128xf32>
    %48 = arith.truncf %44 : vector<64x128xf32> to vector<64x128xbf16>
    %c0_21 = arith.constant 0 : index
    %c0_22 = arith.constant 0 : index
    %49 = vector.load %arg4[%c0_21, %c0_22] : memref<128x128xbf16, #tpu.memory_space<vmem>>, vector<128x128xbf16>
    %cst_23 = arith.constant dense<0.000000e+00> : vector<64x128xf32>
    %50 = tpu.matmul %48, %49, %cst_23 {dimension_numbers = #tpu.dot_dimension_numbers<[1], [0], [0], [1], [0, 0, 1, 1], [], []>} : vector<64x128xbf16>, vector<128x128xbf16>, vector<64x128xf32> -> vector<64x128xf32>
    %51 = arith.addf %47, %50 : vector<64x128xf32>
    %c0_24 = arith.constant 0 : index
    %c0_25 = arith.constant 0 : index
    %52 = vector.load %arg5[%c0_24, %c0_25] : memref<64x128xf32, #tpu.memory_space<vmem>>, vector<64x128xf32>
    tpu.vector_store %arg5[%c0_24, %c0_25], %51 {strides = array<i32>} : memref<64x128xf32, #tpu.memory_space<vmem>>, vector<64x128xf32>,
    return
  }
  func.func @transform_0(%arg0: i32) -> (i32, i32, i32, i32) {
    %c0_i32 = arith.constant 0 : i32
    %c0_i32_0 = arith.constant 0 : i32
    %c0_i32_1 = arith.constant 0 : i32
    %c0_i32_2 = arith.constant 0 : i32
    return %arg0, %c0_i32, %c0_i32_0, %c0_i32_1 : i32, i32, i32, i32
  }
  func.func @transform_1(%arg0: i32) -> (i32, i32) {
    %c0_i32 = arith.constant 0 : i32
    %c0_i32_0 = arith.constant 0 : i32
    %c0_i32_1 = arith.constant 0 : i32
    return %c0_i32, %c0_i32_0 : i32, i32
  }
  func.func @transform_2(%arg0: i32) -> (i32, i32) {
    %c0_i32 = arith.constant 0 : i32
    %c0_i32_0 = arith.constant 0 : i32
    %c0_i32_1 = arith.constant 0 : i32
    return %c0_i32, %c0_i32_0 : i32, i32
  }
  func.func @transform_3(%arg0: i32) -> (i32, i32) {
    %c0_i32 = arith.constant 0 : i32
    %c0_i32_0 = arith.constant 0 : i32
    %c0_i32_1 = arith.constant 0 : i32
    return %c0_i32, %c0_i32_0 : i32, i32
  }
  func.func @transform_4(%arg0: i32) -> (i32, i32) {
    %c0_i32 = arith.constant 0 : i32
    %c0_i32_0 = arith.constant 0 : i32
    return %arg0, %c0_i32 : i32, i32
  }
}

</mosaic_0001>

<llo_original>
// kernel: patch_merging_forward.1
$region0: #{patch_merging_forward.1}
  #allocation0 [shape = 'u32[]', space=smem, size = 0x4, offset = 0x4, fixed_abs, tag = 'smem constant byte address 0x4 - core index']
  #allocation1 [shape = 'u32[72,128]{1,0:T(1,128)}', space=vmem, size = 0x9000, scoped, tag = 'internal scratch']
  %s0 = inlined_call_operand.vmem [shape: f32[16,2,8,128], index: 0, kind: input, shape index: {}]
  %s1 = inlined_call_operand.vmem [shape: f32[4,128], index: 1, kind: input, shape index: {}]
  %s2 = inlined_call_operand.vmem [shape: bf16[128,128], index: 2, kind: input, shape index: {}]
  %s3 = inlined_call_operand.vmem [shape: bf16[128,128], index: 3, kind: input, shape index: {}]
  %s4 = inlined_call_operand.hbm [shape: f32[128,128], index: 4, kind: output, shape index: {}]
  %s5 = sld [smem:[#allocation0]]
  $region49: #{patch_merging_forward.1} parent=0
    _
  %s7 = ssub.s32 1, %s5
  %s8 = scalar_select 0, %s7, %s5
  $region1: #{patch_merging_forward.1} parent=0
    #allocation2 [shape = 'u8[65536]{0}', space=vmem, size = 0x10000, scoped, tag = 'output window, operand 0']
    #allocation3 [shape = 's32[2]{0}', space=sflag, size = 0x8, scoped, tag = 'scoped memory for patch_merging_forward.1']
    %9 = vsyncpa [#allocation3], 0
    %s10 = scalar_lea.sflag [#allocation3], 1
    %11 = vsyncpa %s10, 0
    loop: start=0, step=1, limit=4
    $region2: #{patch_merging_forward.1} parent=1 // loop_pre_header
      _
    $region3: #{patch_merging_forward.1} parent=1 // loop_header
      %s13 = sphi 0, %s17
      %p14 = scmp.ge.s32.totalorder %s13, 4
      %s23 = sphi 0, %s25
      %s26 = sphi 0, %s23
      %s27 = sphi 0, %s26
      %s43 = sphi 0, %s27
      %s47 = sphi 0, %s47
      %s49 = sphi 0, %s47
      %s50 = sphi 0, %s49
      %s64 = sphi 0, %s50
      %s68 = sphi 0, %s68
      %s70 = sphi 0, %s68
      %s71 = sphi 0, %s70
      %s85 = sphi 0, %s71
      %s89 = sphi 0, %s89
      %s91 = sphi 0, %s89
      %s92 = sphi 0, %s91
      %s106 = sphi 0, %s92
      %s112 = sphi 0, %s114
      %s115 = sphi 0, %s112
      %s116 = sphi 0, %s115
      %s132 = sphi 0, %s116
    $region4: #{patch_merging_forward.1} parent=1 // loop_header_branch
      %16 = sbr.rel (%p14) target = $region8
    $region5: #{patch_merging_forward.1} parent=1 // loop_body
      %s18 = ssub.s32 %s13, 1
      %s19 = ssub.s32 %s13, 2
      %s20 = sadd.s32 %s13, 1
      %s21 = ssub.s32 %s13, %s20
      %p22 = scmp.eq.s32.totalorder %s21, 0
      %s24 = sadd.s32 %s23, 1
      %s25 = scalar_select %p22, %s23, %s24
      %p28 = pneg %p22
      %p29 = scmp.eq.s32.totalorder %s13, 1
      %p30 = por %p28, %p29
      %p31 = scmp.ne.s32.totalorder %s23, %s26
      %p32 = scmp.eq.s32.totalorder %s13, 0
      %p33 = por %p31, %p32
      %p34 = scmp.ne.s32.totalorder %s23, %s26
      %p35 = scmp.eq.s32.totalorder %s18, 1
      %p36 = por %p34, %p35
      %p37 = scmp.ne.s32.totalorder %s26, %s27
      %p38 = scmp.eq.s32.totalorder %s18, 0
      %p39 = por %p37, %p38
      %p40 = scmp.ne.s32.totalorder %s26, %s27
      %p41 = scmp.eq.s32.totalorder %s19, 1
      %p42 = por %p40, %p41
      %p44 = scmp.ne.s32.totalorder %s27, %s43
      %p45 = scmp.eq.s32.totalorder %s19, 0
      %p46 = por %p44, %p45
      %s48 = sadd.s32 %s47, 1
      %p51 = scmp.eq.s32.totalorder %s13, 1
      %p52 = scmp.ne.s32.totalorder %s47, %s49
      %p53 = scmp.eq.s32.totalorder %s13, 0
      %p54 = por %p52, %p53
      %p55 = scmp.ne.s32.totalorder %s47, %s49
      %p56 = scmp.eq.s32.totalorder %s18, 1
      %p57 = por %p55, %p56
      %p58 = scmp.ne.s32.totalorder %s49, %s50
      %p59 = scmp.eq.s32.totalorder %s18, 0
      %p60 = por %p58, %p59
      %p61 = scmp.ne.s32.totalorder %s49, %s50
      %p62 = scmp.eq.s32.totalorder %s19, 1
      %p63 = por %p61, %p62
      %p65 = scmp.ne.s32.totalorder %s50, %s64
      %p66 = scmp.eq.s32.totalorder %s19, 0
      %p67 = por %p65, %p66
      %s69 = sadd.s32 %s68, 1
      %p72 = scmp.eq.s32.totalorder %s13, 1
      %p73 = scmp.ne.s32.totalorder %s68, %s70
      %p74 = scmp.eq.s32.totalorder %s13, 0
      %p75 = por %p73, %p74
      %p76 = scmp.ne.s32.totalorder %s68, %s70
      %p77 = scmp.eq.s32.totalorder %s18, 1
      %p78 = por %p76, %p77
      %p79 = scmp.ne.s32.totalorder %s70, %s71
      %p80 = scmp.eq.s32.totalorder %s18, 0
      %p81 = por %p79, %p80
      %p82 = scmp.ne.s32.totalorder %s70, %s71
      %p83 = scmp.eq.s32.totalorder %s19, 1
      %p84 = por %p82, %p83
      %p86 = scmp.ne.s32.totalorder %s71, %s85
      %p87 = scmp.eq.s32.totalorder %s19, 0
      %p88 = por %p86, %p87
      %s90 = sadd.s32 %s89, 1
      %p93 = scmp.eq.s32.totalorder %s13, 1
      %p94 = scmp.ne.s32.totalorder %s89, %s91
      %p95 = scmp.eq.s32.totalorder %s13, 0
      %p96 = por %p94, %p95
      %p97 = scmp.ne.s32.totalorder %s89, %s91
      %p98 = scmp.eq.s32.totalorder %s18, 1
      %p99 = por %p97, %p98
      %p100 = scmp.ne.s32.totalorder %s91, %s92
      %p101 = scmp.eq.s32.totalorder %s18, 0
      %p102 = por %p100, %p101
      %p103 = scmp.ne.s32.totalorder %s91, %s92
      %p104 = scmp.eq.s32.totalorder %s19, 1
      %p105 = por %p103, %p104
      %p107 = scmp.ne.s32.totalorder %s92, %s106
      %p108 = scmp.eq.s32.totalorder %s19, 0
      %p109 = por %p107, %p108
      %s110 = ssub.s32 %s13, %s20
      %p111 = scmp.eq.s32.totalorder %s110, 0
      %s113 = sadd.s32 %s112, 1
      %s114 = scalar_select %p111, %s112, %s113
      %p117 = pneg %p111
      %p118 = scmp.eq.s32.totalorder %s13, 1
      %p119 = por %p117, %p118
      %p120 = scmp.ne.s32.totalorder %s112, %s115
      %p121 = scmp.eq.s32.totalorder %s13, 0
      %p122 = por %p120, %p121
      %p123 = scmp.ne.s32.totalorder %s112, %s115
      %p124 = scmp.eq.s32.totalorder %s18, 1
      %p125 = por %p123, %p124
      %p126 = scmp.ne.s32.totalorder %s115, %s116
      %p127 = scmp.eq.s32.totalorder %s18, 0
      %p128 = por %p126, %p127
      %p129 = scmp.ne.s32.totalorder %s115, %s116
      %p130 = scmp.eq.s32.totalorder %s19, 1
      %p131 = por %p129, %p130
      %p133 = scmp.ne.s32.totalorder %s116, %s132
      %p134 = scmp.eq.s32.totalorder %s19, 0
      %p135 = por %p133, %p134
      %p136 = scmp.le.s32.totalorder 1, %s13
      %p137 = scmp.lt.s32.totalorder %s13, 3
      %p138 = pnand %p136, %p137
      %p139 = pneg %p138
      // Predicated region
      $region9: #{patch_merging_forward.1} parent=5 // pred_check
        _
      $region10: #{patch_merging_forward.1} parent=5 // pred_check_branch
        %141 = sbr.rel (%p138) target = $region12
      $region11: #{patch_merging_forward.1} parent=5 // pred_region
        %s142 = ssub.s32 %s13, 1
        // Predicated region
        $region13: #{patch_merging_forward.1} parent=11 // pred_check
          %p143 = pneg %p60
        $region14: #{patch_merging_forward.1} parent=11 // pred_check_branch
          %145 = sbr.rel (%p143) target = $region16
        $region15: #{patch_merging_forward.1} parent=11 // pred_region
          _
        $region16: #{patch_merging_forward.1} parent=11 // pred_fallthru
          _
        // Predicated region
        $region17: #{patch_merging_forward.1} parent=11 // pred_check
          %p146 = pneg %p81
        $region18: #{patch_merging_forward.1} parent=11 // pred_check_branch
          %148 = sbr.rel (%p146) target = $region20
        $region19: #{patch_merging_forward.1} parent=11 // pred_region
          _
        $region20: #{patch_merging_forward.1} parent=11 // pred_fallthru
          _
        // Predicated region
        $region21: #{patch_merging_forward.1} parent=11 // pred_check
          %p149 = pneg %p102
        $region22: #{patch_merging_forward.1} parent=11 // pred_check_branch
          %151 = sbr.rel (%p149) target = $region24
        $region23: #{patch_merging_forward.1} parent=11 // pred_region
          _
        $region24: #{patch_merging_forward.1} parent=11 // pred_fallthru
          _
      $region12: #{patch_merging_forward.1} parent=5 // pred_fallthru
        _
      %p152 = scmp.lt.s32.totalorder %s13, 2
      // Predicated region
      $region25: #{patch_merging_forward.1} parent=5 // pred_check
        %p153 = pneg %p152
      $region26: #{patch_merging_forward.1} parent=5 // pred_check_branch
        %155 = sbr.rel (%p153) target = $region28
      $region27: #{patch_merging_forward.1} parent=5 // pred_region
        // Predicated region
        $region29: #{patch_merging_forward.1} parent=27 // pred_check
          %p156 = pneg %p33
        $region30: #{patch_merging_forward.1} parent=27 // pred_check_branch
          %158 = sbr.rel (%p156) target = $region32
        $region31: #{patch_merging_forward.1} parent=27 // pred_region
          %s159 = smul.u32 8, %s13
          %p160 = scmp.lt.s32.totalorder %s159, 15
          %s161 = scalar_select %p160, %s159, 15
          %s162 = smul.addr %s161, 2
          %s163 = smul.addr %s162, 8
          %s164 = scalar_lea.vmem %s0, %s163
          %s165 = smul.u32 8, %s13
        $region32: #{patch_merging_forward.1} parent=27 // pred_fallthru
          _
      $region28: #{patch_merging_forward.1} parent=5 // pred_fallthru
        _
      %p166 = scmp.le.s32.totalorder 1, %s13
      %p167 = scmp.lt.s32.totalorder %s13, 3
      %p168 = pnand %p166, %p167
      %p169 = pneg %p168
      // Predicated region
      $region33: #{patch_merging_forward.1} parent=5 // pred_check
        _
      $region34: #{patch_merging_forward.1} parent=5 // pred_check_branch
        %171 = sbr.rel (%p168) target = $region36
      $region35: #{patch_merging_forward.1} parent=5 // pred_region
        %s172 = ssub.s32 %s13, 1
        %s173 = smul.u32 8, %s18
        %p174 = scmp.lt.s32.totalorder %s173, 15
        %s175 = scalar_select %p174, %s173, 15
        %s176 = smul.addr %s175, 2
        %s177 = smul.addr %s176, 8
        %s178 = scalar_lea.vmem %s0, %s177
        %p179 = pneg %p39
        %p180 = pneg %p36
        %p181 = pneg %p60
        %p182 = pneg %p57
        %p183 = pneg %p81
        %p184 = pneg %p78
        %p185 = pneg %p102
        %p186 = pneg %p99
        %p187 = pneg %p128
        %p188 = pneg %p125
        %s189 = sand.u32 %s115, 1
        %s190 = scalar_lea.sflag [#allocation3], %s189
        %s191 = sand.u32 %s115, 1
        %s192 = smul.addr %s191, 64
        %s193 = scalar_lea.vmem [#allocation2], %s192
        %s194 = smul.u32 8, %s18
        %p195 = scmp.lt.s32.totalorder %s194, 15
        %s196 = scalar_select %p195, %s194, 15
        %s197 = smul.addr %s196, 2
        %s198 = smul.addr %s197, 8
        %s199 = scalar_lea.vmem %s0, %s198
        %s200 = smul.u32 8, %s18
        %s201 = smul.u32 8, %s18
        %v202 = vld [vmem:[%s199] sm:$0xff]
        %v203 = vld [vmem:[%s199 + $0x10] sm:$0xff]
        %v204 = vld [vmem:[%s199 + $0x20] sm:$0xff]
        %v205 = vld [vmem:[%s199 + $0x30] sm:$0xff]
        %v206 = vld [vmem:[%s199 + $0x40] sm:$0xff]
        %v207 = vld [vmem:[%s199 + $0x50] sm:$0xff]
        %v208 = vld [vmem:[%s199 + $0x60] sm:$0xff]
        %v209 = vld [vmem:[%s199 + $0x70] sm:$0xff]
        %s210 = scalar_lea.vmem %s199, 8
        %v211 = vld [vmem:[%s210] sm:$0xff]
        %v212 = vld [vmem:[%s210 + $0x10] sm:$0xff]
        %v213 = vld [vmem:[%s210 + $0x20] sm:$0xff]
        %v214 = vld [vmem:[%s210 + $0x30] sm:$0xff]
        %v215 = vld [vmem:[%s210 + $0x40] sm:$0xff]
        %v216 = vld [vmem:[%s210 + $0x50] sm:$0xff]
        %v217 = vld [vmem:[%s210 + $0x60] sm:$0xff]
        %v218 = vld [vmem:[%s210 + $0x70] sm:$0xff]
        %219 = vadd.xlane.f32.xlu0 %v202
        %v220 = vpop.xlane.xlu0 %219
        %221 = vadd.xlane.f32.xlu0 %v203
        %v222 = vpop.xlane.xlu0 %221
        %223 = vadd.xlane.f32.xlu0 %v204
        %v224 = vpop.xlane.xlu0 %223
        %225 = vadd.xlane.f32.xlu0 %v205
        %v226 = vpop.xlane.xlu0 %225
        %227 = vadd.xlane.f32.xlu0 %v206
        %v228 = vpop.xlane.xlu0 %227
        %229 = vadd.xlane.f32.xlu0 %v207
        %v230 = vpop.xlane.xlu0 %229
        %231 = vadd.xlane.f32.xlu0 %v208
        %v232 = vpop.xlane.xlu0 %231
        %233 = vadd.xlane.f32.xlu0 %v209
        %v234 = vpop.xlane.xlu0 %233
        %235 = vadd.xlane.f32.xlu0 %v211
        %v236 = vpop.xlane.xlu0 %235
        %237 = vadd.xlane.f32.xlu0 %v212
        %v238 = vpop.xlane.xlu0 %237
        %239 = vadd.xlane.f32.xlu0 %v213
        %v240 = vpop.xlane.xlu0 %239
        %241 = vadd.xlane.f32.xlu0 %v214
        %v242 = vpop.xlane.xlu0 %241
        %243 = vadd.xlane.f32.xlu0 %v215
        %v244 = vpop.xlane.xlu0 %243
        %245 = vadd.xlane.f32.xlu0 %v216
        %v246 = vpop.xlane.xlu0 %245
        %247 = vadd.xlane.f32.xlu0 %v217
        %v248 = vpop.xlane.xlu0 %247
        %249 = vadd.xlane.f32.xlu0 %v218
        %v250 = vpop.xlane.xlu0 %249
        %v251 = vadd.f32 %v220, %v236
        %v252 = vadd.f32 %v222, %v238
        %v253 = vadd.f32 %v224, %v240
        %v254 = vadd.f32 %v226, %v242
        %v255 = vadd.f32 %v228, %v244
        %v256 = vadd.f32 %v230, %v246
        %v257 = vadd.f32 %v232, %v248
        %v258 = vadd.f32 %v234, %v250
        %v259 = vmul.f32 %v251, 0.00390625
        %v260 = vmul.f32 %v252, 0.00390625
        %v261 = vmul.f32 %v253, 0.00390625
        %v262 = vmul.f32 %v254, 0.00390625
        %v263 = vmul.f32 %v255, 0.00390625
        %v264 = vmul.f32 %v256, 0.00390625
        %v265 = vmul.f32 %v257, 0.00390625
        %v266 = vmul.f32 %v258, 0.00390625
        %v267 = vsub.f32 %v202, %v259
        %v268 = vsub.f32 %v203, %v260
        %v269 = vsub.f32 %v204, %v261
        %v270 = vsub.f32 %v205, %v262
        %v271 = vsub.f32 %v206, %v263
        %v272 = vsub.f32 %v207, %v264
        %v273 = vsub.f32 %v208, %v265
        %v274 = vsub.f32 %v209, %v266
        %v275 = vsub.f32 %v211, %v259
        %v276 = vsub.f32 %v212, %v260
        %v277 = vsub.f32 %v213, %v261
        %v278 = vsub.f32 %v214, %v262
        %v279 = vsub.f32 %v215, %v263
        %v280 = vsub.f32 %v216, %v264
        %v281 = vsub.f32 %v217, %v265
        %v282 = vsub.f32 %v218, %v266
        %v283 = vmul.f32 %v267, %v267
        %v284 = vmul.f32 %v268, %v268
        %v285 = vmul.f32 %v269, %v269
        %v286 = vmul.f32 %v270, %v270
        %v287 = vmul.f32 %v271, %v271
        %v288 = vmul.f32 %v272, %v272
        %v289 = vmul.f32 %v273, %v273
        %v290 = vmul.f32 %v274, %v274
        %291 = vadd.xlane.f32.xlu0 %v283
        %v292 = vpop.xlane.xlu0 %291
        %293 = vadd.xlane.f32.xlu0 %v284
        %v294 = vpop.xlane.xlu0 %293
        %295 = vadd.xlane.f32.xlu0 %v285
        %v296 = vpop.xlane.xlu0 %295
        %297 = vadd.xlane.f32.xlu0 %v286
        %v298 = vpop.xlane.xlu0 %297
        %299 = vadd.xlane.f32.xlu0 %v287
        %v300 = vpop.xlane.xlu0 %299
        %301 = vadd.xlane.f32.xlu0 %v288
        %v302 = vpop.xlane.xlu0 %301
        %303 = vadd.xlane.f32.xlu0 %v289
        %v304 = vpop.xlane.xlu0 %303
        %305 = vadd.xlane.f32.xlu0 %v290
        %v306 = vpop.xlane.xlu0 %305
        %v307 = vmul.f32 %v275, %v275
        %v308 = vmul.f32 %v276, %v276
        %v309 = vmul.f32 %v277, %v277
        %v310 = vmul.f32 %v278, %v278
        %v311 = vmul.f32 %v279, %v279
        %v312 = vmul.f32 %v280, %v280
        %v313 = vmul.f32 %v281, %v281
        %v314 = vmul.f32 %v282, %v282
        %315 = vadd.xlane.f32.xlu0 %v307
        %v316 = vpop.xlane.xlu0 %315
        %317 = vadd.xlane.f32.xlu0 %v308
        %v318 = vpop.xlane.xlu0 %317
        %319 = vadd.xlane.f32.xlu0 %v309
        %v320 = vpop.xlane.xlu0 %319
        %321 = vadd.xlane.f32.xlu0 %v310
        %v322 = vpop.xlane.xlu0 %321
        %323 = vadd.xlane.f32.xlu0 %v311
        %v324 = vpop.xlane.xlu0 %323
        %325 = vadd.xlane.f32.xlu0 %v312
        %v326 = vpop.xlane.xlu0 %325
        %327 = vadd.xlane.f32.xlu0 %v313
        %v328 = vpop.xlane.xlu0 %327
        %329 = vadd.xlane.f32.xlu0 %v314
        %v330 = vpop.xlane.xlu0 %329
        %v331 = vadd.f32 %v292, %v316
        %v332 = vadd.f32 %v294, %v318
        %v333 = vadd.f32 %v296, %v320
        %v334 = vadd.f32 %v298, %v322
        %v335 = vadd.f32 %v300, %v324
        %v336 = vadd.f32 %v302, %v326
        %v337 = vadd.f32 %v304, %v328
        %v338 = vadd.f32 %v306, %v330
        %v339 = vmul.f32 %v331, 0.00390625
        %v340 = vmul.f32 %v332, 0.00390625
        %v341 = vmul.f32 %v333, 0.00390625
        %v342 = vmul.f32 %v334, 0.00390625
        %v343 = vmul.f32 %v335, 0.00390625
        %v344 = vmul.f32 %v336, 0.00390625
        %v345 = vmul.f32 %v337, 0.00390625
        %v346 = vmul.f32 %v338, 0.00390625
        %v347 = vadd.f32 %v339, 1e-05
        %v348 = vadd.f32 %v340, 1e-05
        %v349 = vadd.f32 %v341, 1e-05
        %v350 = vadd.f32 %v342, 1e-05
        %v351 = vadd.f32 %v343, 1e-05
        %v352 = vadd.f32 %v344, 1e-05
        %v353 = vadd.f32 %v345, 1e-05
        %v354 = vadd.f32 %v346, 1e-05
        %v355 = vrsqrt.pop %v347
        %v356 = vmul.f32 %v355, %v347
        %v357 = vmul.f32 %v356, %v355
        %v358 = vmul.f32 0.5, %v357
        %v359 = vsub.f32 1.5, %v358
        %v360 = vmul.f32 %v355, %v359
        %vm361 = vweird.f32 %v347
        %vm362 = vweird.f32 %v355
        %vm363 = vmor %vm361, %vm362
        %v364 = vsel %vm363, %v355, %v360
        %v365 = vrsqrt.pop %v348
        %v366 = vmul.f32 %v365, %v348
        %v367 = vmul.f32 %v366, %v365
        %v368 = vmul.f32 0.5, %v367
        %v369 = vsub.f32 1.5, %v368
        %v370 = vmul.f32 %v365, %v369
        %vm371 = vweird.f32 %v348
        %vm372 = vweird.f32 %v365
        %vm373 = vmor %vm371, %vm372
        %v374 = vsel %vm373, %v365, %v370
        %v375 = vrsqrt.pop %v349
        %v376 = vmul.f32 %v375, %v349
        %v377 = vmul.f32 %v376, %v375
        %v378 = vmul.f32 0.5, %v377
        %v379 = vsub.f32 1.5, %v378
        %v380 = vmul.f32 %v375, %v379
        %vm381 = vweird.f32 %v349
        %vm382 = vweird.f32 %v375
        %vm383 = vmor %vm381, %vm382
        %v384 = vsel %vm383, %v375, %v380
        %v385 = vrsqrt.pop %v350
        %v386 = vmul.f32 %v385, %v350
        %v387 = vmul.f32 %v386, %v385
        %v388 = vmul.f32 0.5, %v387
        %v389 = vsub.f32 1.5, %v388
        %v390 = vmul.f32 %v385, %v389
        %vm391 = vweird.f32 %v350
        %vm392 = vweird.f32 %v385
        %vm393 = vmor %vm391, %vm392
        %v394 = vsel %vm393, %v385, %v390
        %v395 = vrsqrt.pop %v351
        %v396 = vmul.f32 %v395, %v351
        %v397 = vmul.f32 %v396, %v395
        %v398 = vmul.f32 0.5, %v397
        %v399 = vsub.f32 1.5, %v398
        %v400 = vmul.f32 %v395, %v399
        %vm401 = vweird.f32 %v351
        %vm402 = vweird.f32 %v395
        %vm403 = vmor %vm401, %vm402
        %v404 = vsel %vm403, %v395, %v400
        %v405 = vrsqrt.pop %v352
        %v406 = vmul.f32 %v405, %v352
        %v407 = vmul.f32 %v406, %v405
        %v408 = vmul.f32 0.5, %v407
        %v409 = vsub.f32 1.5, %v408
        %v410 = vmul.f32 %v405, %v409
        %vm411 = vweird.f32 %v352
        %vm412 = vweird.f32 %v405
        %vm413 = vmor %vm411, %vm412
        %v414 = vsel %vm413, %v405, %v410
        %v415 = vrsqrt.pop %v353
        %v416 = vmul.f32 %v415, %v353
        %v417 = vmul.f32 %v416, %v415
        %v418 = vmul.f32 0.5, %v417
        %v419 = vsub.f32 1.5, %v418
        %v420 = vmul.f32 %v415, %v419
        %vm421 = vweird.f32 %v353
        %vm422 = vweird.f32 %v415
        %vm423 = vmor %vm421, %vm422
        %v424 = vsel %vm423, %v415, %v420
        %v425 = vrsqrt.pop %v354
        %v426 = vmul.f32 %v425, %v354
        %v427 = vmul.f32 %v426, %v425
        %v428 = vmul.f32 0.5, %v427
        %v429 = vsub.f32 1.5, %v428
        %v430 = vmul.f32 %v425, %v429
        %vm431 = vweird.f32 %v354
        %vm432 = vweird.f32 %v425
        %vm433 = vmor %vm431, %vm432
        %v434 = vsel %vm433, %v425, %v430
        %v435 = vmul.f32 %v267, %v364
        %v436 = vmul.f32 %v268, %v374
        %v437 = vmul.f32 %v269, %v384
        %v438 = vmul.f32 %v270, %v394
        %v439 = vmul.f32 %v271, %v404
        %v440 = vmul.f32 %v272, %v414
        %v441 = vmul.f32 %v273, %v424
        %v442 = vmul.f32 %v274, %v434
        %v443 = vld [vmem:[%s1] sm:$0x1]
        %v444 = vperm.slane %v443, 0
        %v445 = vmul.f32 %v435, %v444
        %v446 = vmul.f32 %v436, %v444
        %v447 = vmul.f32 %v437, %v444
        %v448 = vmul.f32 %v438, %v444
        %v449 = vmul.f32 %v439, %v444
        %v450 = vmul.f32 %v440, %v444
        %v451 = vmul.f32 %v441, %v444
        %v452 = vmul.f32 %v442, %v444
        %v453 = vld [vmem:[%s1 + $0x2] sm:$0x1]
        %v454 = vperm.slane %v453, 0
        %v455 = vadd.f32 %v445, %v454
        %v456 = vadd.f32 %v446, %v454
        %v457 = vadd.f32 %v447, %v454
        %v458 = vadd.f32 %v448, %v454
        %v459 = vadd.f32 %v449, %v454
        %v460 = vadd.f32 %v450, %v454
        %v461 = vadd.f32 %v451, %v454
        %v462 = vadd.f32 %v452, %v454
        %v463 = vmul.f32 %v275, %v364
        %v464 = vmul.f32 %v276, %v374
        %v465 = vmul.f32 %v277, %v384
        %v466 = vmul.f32 %v278, %v394
        %v467 = vmul.f32 %v279, %v404
        %v468 = vmul.f32 %v280, %v414
        %v469 = vmul.f32 %v281, %v424
        %v470 = vmul.f32 %v282, %v434
        %v471 = vld [vmem:[%s1 + $0x1] sm:$0x1]
        %v472 = vperm.slane %v471, 0
        %v473 = vmul.f32 %v463, %v472
        %v474 = vmul.f32 %v464, %v472
        %v475 = vmul.f32 %v465, %v472
        %v476 = vmul.f32 %v466, %v472
        %v477 = vmul.f32 %v467, %v472
        %v478 = vmul.f32 %v468, %v472
        %v479 = vmul.f32 %v469, %v472
        %v480 = vmul.f32 %v470, %v472
        %v481 = vld [vmem:[%s1 + $0x3] sm:$0x1]
        %v482 = vperm.slane %v481, 0
        %v483 = vadd.f32 %v473, %v482
        %v484 = vadd.f32 %v474, %v482
        %v485 = vadd.f32 %v475, %v482
        %v486 = vadd.f32 %v476, %v482
        %v487 = vadd.f32 %v477, %v482
        %v488 = vadd.f32 %v478, %v482
        %v489 = vadd.f32 %v479, %v482
        %v490 = vadd.f32 %v480, %v482
        %v491 = vpack.c.bf16 %v456, %v455
        %v492 = vpack.c.bf16 %v458, %v457
        %v493 = vpack.c.bf16 %v460, %v459
        %v494 = vpack.c.bf16 %v462, %v461
        %v495 = vld [vmem:[%s2] sm:$0xf]
        %v496 = vld [vmem:[%s2 + $0x4] sm:$0xf]
        %v497 = vld [vmem:[%s2 + $0x8] sm:$0xf]
        %v498 = vld [vmem:[%s2 + $0xc] sm:$0xf]
        %v499 = vld [vmem:[%s2 + $0x10] sm:$0xf]
        %v500 = vld [vmem:[%s2 + $0x14] sm:$0xf]
        %v501 = vld [vmem:[%s2 + $0x18] sm:$0xf]
        %v502 = vld [vmem:[%s2 + $0x1c] sm:$0xf]
        %v503 = vld [vmem:[%s2 + $0x20] sm:$0xf]
        %v504 = vld [vmem:[%s2 + $0x24] sm:$0xf]
        %v505 = vld [vmem:[%s2 + $0x28] sm:$0xf]
        %v506 = vld [vmem:[%s2 + $0x2c] sm:$0xf]
        %v507 = vld [vmem:[%s2 + $0x30] sm:$0xf]
        %v508 = vld [vmem:[%s2 + $0x34] sm:$0xf]
        %v509 = vld [vmem:[%s2 + $0x38] sm:$0xf]
        %v510 = vld [vmem:[%s2 + $0x3c] sm:$0xf]
        %v511 = vpack.c.bf16 %v484, %v483
        %v512 = vpack.c.bf16 %v486, %v485
        %v513 = vpack.c.bf16 %v488, %v487
        %v514 = vpack.c.bf16 %v490, %v489
        %v515 = vld [vmem:[%s3] sm:$0xf]
        %v516 = vld [vmem:[%s3 + $0x4] sm:$0xf]
        %v517 = vld [vmem:[%s3 + $0x8] sm:$0xf]
        %v518 = vld [vmem:[%s3 + $0xc] sm:$0xf]
        %v519 = vld [vmem:[%s3 + $0x10] sm:$0xf]
        %v520 = vld [vmem:[%s3 + $0x14] sm:$0xf]
        %v521 = vld [vmem:[%s3 + $0x18] sm:$0xf]
        %v522 = vld [vmem:[%s3 + $0x1c] sm:$0xf]
        %v523 = vld [vmem:[%s3 + $0x20] sm:$0xf]
        %v524 = vld [vmem:[%s3 + $0x24] sm:$0xf]
        %v525 = vld [vmem:[%s3 + $0x28] sm:$0xf]
        %v526 = vld [vmem:[%s3 + $0x2c] sm:$0xf]
        %v527 = vld [vmem:[%s3 + $0x30] sm:$0xf]
        %v528 = vld [vmem:[%s3 + $0x34] sm:$0xf]
        %v529 = vld [vmem:[%s3 + $0x38] sm:$0xf]
        %v530 = vld [vmem:[%s3 + $0x3c] sm:$0xf]
        %v547 = vunpack.c.l.b16 %v515
        %v548 = vunpack.c.l.b16 %v516
        %v549 = vunpack.c.l.b16 %v517
        %v550 = vunpack.c.l.b16 %v518
        %v551 = vunpack.c.l.b16 %v519
        %v552 = vunpack.c.l.b16 %v520
        %v553 = vunpack.c.l.b16 %v521
        %v554 = vunpack.c.l.b16 %v522
        %v555 = vunpack.c.l.b16 %v523
        %v556 = vunpack.c.l.b16 %v524
        %v557 = vunpack.c.l.b16 %v525
        %v558 = vunpack.c.l.b16 %v526
        %v559 = vunpack.c.l.b16 %v527
        %v560 = vunpack.c.l.b16 %v528
        %v561 = vunpack.c.l.b16 %v529
        %v562 = vunpack.c.l.b16 %v530
        %v563 = vpack.c.b16 %v548, %v547
        %v564 = vpack.c.b16 %v550, %v549
        %v565 = vpack.c.b16 %v552, %v551
        %v566 = vpack.c.b16 %v554, %v553
        %v567 = vpack.c.b16 %v556, %v555
        %v568 = vpack.c.b16 %v558, %v557
        %v569 = vpack.c.b16 %v560, %v559
        %v570 = vpack.c.b16 %v562, %v561
        %579 = vmatpush.bf16.msra.mxu0 %v570
        %580 = vmatpush.bf16.msra.mxu0 %v569
        %581 = vmatpush.bf16.msra.mxu0 %v568
        %582 = vmatpush.bf16.msra.mxu0 %v567
        %583 = vmatpush.bf16.msra.mxu0 %v566
        %584 = vmatpush.bf16.msra.mxu0 %v565
        %585 = vmatpush.bf16.msra.mxu0 %v564
        %586 = vmatpush.bf16.msra.mxu0 %v563
        %587 = vmatmul.bf16.gmra.mxu0 %v511
        %v588 = vpop.f32.mrf.mxu0
        %v589 = vadd.f32 0.0, %v588
        %v590 = vpop.f32.mrf.mxu0
        %v591 = vadd.f32 0.0, %v590
        %592 = vmatmul.bf16.gmra.mxu0 %v512
        %v593 = vpop.f32.mrf.mxu0
        %v594 = vadd.f32 0.0, %v593
        %v595 = vpop.f32.mrf.mxu0
        %v596 = vadd.f32 0.0, %v595
        %597 = vmatmul.bf16.gmra.mxu0 %v513
        %v598 = vpop.f32.mrf.mxu0
        %v599 = vadd.f32 0.0, %v598
        %v600 = vpop.f32.mrf.mxu0
        %v601 = vadd.f32 0.0, %v600
        %602 = vmatmul.bf16.gmra.mxu0 %v514
        %v603 = vpop.f32.mrf.mxu0
        %v604 = vadd.f32 0.0, %v603
        %v605 = vpop.f32.mrf.mxu0
        %v606 = vadd.f32 0.0, %v605
        %607 = vdwg.mxu0
        %v624 = vunpack.c.l.b16 %v495
        %v625 = vunpack.c.l.b16 %v496
        %v626 = vunpack.c.l.b16 %v497
        %v627 = vunpack.c.l.b16 %v498
        %v628 = vunpack.c.l.b16 %v499
        %v629 = vunpack.c.l.b16 %v500
        %v630 = vunpack.c.l.b16 %v501
        %v631 = vunpack.c.l.b16 %v502
        %v632 = vunpack.c.l.b16 %v503
        %v633 = vunpack.c.l.b16 %v504
        %v634 = vunpack.c.l.b16 %v505
        %v635 = vunpack.c.l.b16 %v506
        %v636 = vunpack.c.l.b16 %v507
        %v637 = vunpack.c.l.b16 %v508
        %v638 = vunpack.c.l.b16 %v509
        %v639 = vunpack.c.l.b16 %v510
        %v640 = vpack.c.b16 %v625, %v624
        %v641 = vpack.c.b16 %v627, %v626
        %v642 = vpack.c.b16 %v629, %v628
        %v643 = vpack.c.b16 %v631, %v630
        %v644 = vpack.c.b16 %v633, %v632
        %v645 = vpack.c.b16 %v635, %v634
        %v646 = vpack.c.b16 %v637, %v636
        %v647 = vpack.c.b16 %v639, %v638
        %656 = vmatpush.bf16.msra.mxu0 %v647
        %657 = vmatpush.bf16.msra.mxu0 %v646
        %658 = vmatpush.bf16.msra.mxu0 %v645
        %659 = vmatpush.bf16.msra.mxu0 %v644
        %660 = vmatpush.bf16.msra.mxu0 %v643
        %661 = vmatpush.bf16.msra.mxu0 %v642
        %662 = vmatpush.bf16.msra.mxu0 %v641
        %663 = vmatpush.bf16.msra.mxu0 %v640
        %664 = vmatmul.bf16.gmra.mxu0 %v491
        %v665 = vpop.f32.mrf.mxu0
        %v666 = vadd.f32 %v589, %v665
        %v667 = vpop.f32.mrf.mxu0
        %v668 = vadd.f32 %v591, %v667
        %669 = vmatmul.bf16.gmra.mxu0 %v492
        %v670 = vpop.f32.mrf.mxu0
        %v671 = vadd.f32 %v594, %v670
        %v672 = vpop.f32.mrf.mxu0
        %v673 = vadd.f32 %v596, %v672
        %674 = vmatmul.bf16.gmra.mxu0 %v493
        %v675 = vpop.f32.mrf.mxu0
        %v676 = vadd.f32 %v599, %v675
        %v677 = vpop.f32.mrf.mxu0
        %v678 = vadd.f32 %v601, %v677
        %679 = vmatmul.bf16.gmra.mxu0 %v494
        %v680 = vpop.f32.mrf.mxu0
        %v681 = vadd.f32 %v604, %v680
        %v682 = vpop.f32.mrf.mxu0
        %v683 = vadd.f32 %v606, %v682
        %684 = vdwg.mxu0
        %685 = vst [vmem:[%s193] sm:$0xff] %v666
        %686 = vst [vmem:[%s193 + $0x8] sm:$0xff] %v668
        %687 = vst [vmem:[%s193 + $0x10] sm:$0xff] %v671
        %688 = vst [vmem:[%s193 + $0x18] sm:$0xff] %v673
        %689 = vst [vmem:[%s193 + $0x20] sm:$0xff] %v676
        %690 = vst [vmem:[%s193 + $0x28] sm:$0xff] %v678
        %691 = vst [vmem:[%s193 + $0x30] sm:$0xff] %v681
        %692 = vst [vmem:[%s193 + $0x38] sm:$0xff] %v683
        %s693 = sand.u32 %s115, 1
        %s694 = scalar_lea.sflag [#allocation3], %s693
        %s695 = sand.u32 %s115, 1
        %s696 = smul.addr %s695, 64
        %s697 = scalar_lea.vmem [#allocation2], %s696
        // Predicated region
        $region37: #{patch_merging_forward.1} parent=35 // pred_check
          %p698 = pneg %p125
        $region38: #{patch_merging_forward.1} parent=35 // pred_check_branch
          %700 = sbr.rel (%p698) target = $region40
        $region39: #{patch_merging_forward.1} parent=35 // pred_region
          %s701 = smul.u32 8, %s18
          %703 = vsyncadd %s694, 0
          %s704 = smul.addr %s701, 8
          %s705 = scalar_lea.hbm %s4, %s704
          %s706 = sshll.u32 %s697, 4
          %s707 = int_to_ptr.vmem [resolvable:$true] %s706
          %s708 = sshll.u32 %s705, 4
          %s709 = int_to_ptr.hbm [resolvable:$true] %s708
          %714 = dma.vmem_to_hbm [thread:$0]  %s707, 1024, %s709, %s694, 128, 128, 8
        $region40: #{patch_merging_forward.1} parent=35 // pred_fallthru
          _
      $region36: #{patch_merging_forward.1} parent=5 // pred_fallthru
        _
      %p715 = scmp.le.s32.totalorder 2, %s13
      // Predicated region
      $region41: #{patch_merging_forward.1} parent=5 // pred_check
        %p716 = pneg %p715
      $region42: #{patch_merging_forward.1} parent=5 // pred_check_branch
        %718 = sbr.rel (%p716) target = $region44
      $region43: #{patch_merging_forward.1} parent=5 // pred_region
        %s719 = ssub.s32 %s13, 2
        // Predicated region
        $region45: #{patch_merging_forward.1} parent=43 // pred_check
          %p720 = pneg %p131
        $region46: #{patch_merging_forward.1} parent=43 // pred_check_branch
          %722 = sbr.rel (%p720) target = $region48
        $region47: #{patch_merging_forward.1} parent=43 // pred_region
          %s723 = sand.u32 %s116, 1
          %s724 = scalar_lea.sflag [#allocation3], %s723
          %s725 = sand.u32 %s116, 1
          %s726 = smul.addr %s725, 64
          %s727 = scalar_lea.vmem [#allocation2], %s726
          %729 = dma.done %s724, 1024
        $region48: #{patch_merging_forward.1} parent=43 // pred_fallthru
          _
      $region44: #{patch_merging_forward.1} parent=5 // pred_fallthru
        _
    $region6: #{patch_merging_forward.1} parent=1 // loop_footer
      %s17 = sadd.s32 1, %s13
    $region7: #{patch_merging_forward.1} parent=1 // loop_footer_branch
      %12 = sbr.rel target = $region3
    $region8: #{patch_merging_forward.1} parent=1 // loop_exit
      _
    %730 = vsyncpa [#allocation3], 1
    %s731 = scalar_lea.sflag [#allocation3], 1
    %732 = vsyncpa %s731, 1

</llo_original>
